<compile_context>
chip_gen: v7x
topology: tpu7x:2x2x1
jax: 0.10.0
libtpu: 0.0.40
codegen_flags: <defaults>
</compile_context>

<pallas_src>
import functools

import jax
import jax.numpy as jnp
from jax.experimental import pallas as pl
from jax.experimental.pallas import tpu as pltpu

LN_EPS = 1e-5  # torch.nn.LayerNorm default


def _round_up(x, m):
    return ((x + m - 1) // m) * m


def mlp_kernel(x_ref, w1_ref, b1_ref, g_ref, beta_ref, w2_ref, b2_ref, o_ref, *, true_h):
    # x_ref:  (TB, Hp)  bf16      w1_ref: (Hp, Hp) bf16   w2_ref: (Hp, Cp) bf16
    # b1/g/beta: (1, Hp) f32      b2_ref: (1, Cp) f32     o_ref: (TB, Cp)
    x = x_ref[...]

    # Linear 1: bf16 operands on the MXU, f32 accumulation.
    h = jnp.dot(x, w1_ref[...], preferred_element_type=jnp.float32) + b1_ref[...]

    # LayerNorm over the true (unpadded) feature width.
    col = jax.lax.broadcasted_iota(jnp.int32, h.shape, dimension=1)
    valid = col < true_h
    inv_h = 1.0 / float(true_h)
    h_masked = jnp.where(valid, h, 0.0)
    mean = jnp.sum(h_masked, axis=-1, keepdims=True) * inv_h
    diff = jnp.where(valid, h - mean, 0.0)
    var = jnp.sum(diff * diff, axis=-1, keepdims=True) * inv_h
    hn = diff * jax.lax.rsqrt(var + LN_EPS)
    # gamma/beta are zero-padded, so padded columns stay exactly 0 here.
    hn = hn * g_ref[...] + beta_ref[...]

    # ReLU
    hn = jnp.maximum(hn, 0.0)

    # Dropout(p=0.5): eval mode -> identity.

    # Linear 2: bf16 operands on the MXU, f32 accumulation.
    out = jnp.dot(hn.astype(w2_ref.dtype), w2_ref[...],
                  preferred_element_type=jnp.float32) + b2_ref[...]
    o_ref[...] = out.astype(o_ref.dtype)


def mlp_forward(x, w1, b1, gamma, beta, w2, b2, *, block_b=128):
    """x: (B, H); w1: (H, H); w2: (H, C); biases/gamma/beta 1-D or (1, dim)."""
    B, H = x.shape
    C = w2.shape[1]

    Hp = _round_up(H, 128)          # lane-dense feature width
    Cp = _round_up(C, 128)          # lane-dense output width
    TB = block_b if B >= block_b else _round_up(B, 8)
    Bp = _round_up(B, TB)

    # Zero-pad + cast matmul operands to bf16 once in the wrapper.
    xp = jnp.zeros((Bp, Hp), jnp.bfloat16).at[:B, :H].set(x.astype(jnp.bfloat16))
    w1p = jnp.zeros((Hp, Hp), jnp.bfloat16).at[:H, :H].set(w1.astype(jnp.bfloat16))
    w2p = jnp.zeros((Hp, Cp), jnp.bfloat16).at[:H, :C].set(w2.astype(jnp.bfloat16))
    b1p = jnp.zeros((1, Hp), jnp.float32).at[:, :H].set(jnp.reshape(b1, (1, H)))
    gp = jnp.zeros((1, Hp), jnp.float32).at[:, :H].set(jnp.reshape(gamma, (1, H)))
    betp = jnp.zeros((1, Hp), jnp.float32).at[:, :H].set(jnp.reshape(beta, (1, H)))
    b2p = jnp.zeros((1, Cp), jnp.float32).at[:, :C].set(jnp.reshape(b2, (1, C)))

    grid = (Bp // TB,)

    flops = 2 * Bp * Hp * Hp + 2 * Bp * Hp * Cp
    bytes_accessed = (xp.size * 2 + w1p.size * 2 + w2p.size * 2
                      + (b1p.size + gp.size + betp.size + b2p.size) * 4
                      + Bp * Cp * x.dtype.itemsize)

    out_p = pl.pallas_call(
        functools.partial(mlp_kernel, true_h=H),
        out_shape=jax.ShapeDtypeStruct((Bp, Cp), x.dtype),
        grid=grid,
        in_specs=[
            pl.BlockSpec((TB, Hp), lambda i: (i, 0)),   # x: streamed batch tile
            pl.BlockSpec((Hp, Hp), lambda i: (0, 0)),   # w1: VMEM resident
            pl.BlockSpec((1, Hp), lambda i: (0, 0)),    # b1
            pl.BlockSpec((1, Hp), lambda i: (0, 0)),    # gamma
            pl.BlockSpec((1, Hp), lambda i: (0, 0)),    # beta
            pl.BlockSpec((Hp, Cp), lambda i: (0, 0)),   # w2: VMEM resident
            pl.BlockSpec((1, Cp), lambda i: (0, 0)),    # b2
        ],
        out_specs=pl.BlockSpec((TB, Cp), lambda i: (i, 0)),
        compiler_params=pltpu.CompilerParams(
            dimension_semantics=("parallel",),          # shards batch tiles across TCs on v7x
            vmem_limit_bytes=64 * 1024 * 1024,
        ),
        cost_estimate=pl.CostEstimate(
            flops=flops, transcendentals=Bp, bytes_accessed=bytes_accessed),
    )(xp, w1p, b1p, gp, betp, w2p, b2p)

    # Strip batch / class padding (padded output columns are exact zeros).
    return out_p[:B, :C]


def xavier_uniform(key, fan_in, fan_out, dtype=jnp.float32):
    bound = (6.0 / (fan_in + fan_out)) ** 0.5
    # Stored as (in, out) so forward is x @ W (== torch Linear weight.T).
    return jax.random.uniform(key, (fan_in, fan_out), dtype, -bound, bound)


if __name__ == "__main__":
    B = 8      # batch
    H = 32     # hidden_channels
    C = 4      # num_classes

    key = jax.random.PRNGKey(0)
    kx, kw1, kw2 = jax.random.split(key, 3)

    x = jax.random.normal(kx, (B, H), jnp.float32)

    # Parameters matching the module's _init_weights (xavier_uniform weights, zero biases,
    # LayerNorm default gamma=1 / beta=0).
    w1 = xavier_uniform(kw1, H, H)
    b1 = jnp.zeros((H,), jnp.float32)
    gamma = jnp.ones((H,), jnp.float32)
    beta = jnp.zeros((H,), jnp.float32)
    w2 = xavier_uniform(kw2, H, C)
    b2 = jnp.zeros((C,), jnp.float32)

    out = mlp_forward(x, w1, b1, gamma, beta, w2, b2)
    out = jax.block_until_ready(out)
    assert out.shape == (B, C)

    # Pure-JAX reference with matching bf16 matmul operands / f32 accumulation.
    h = jnp.dot(x.astype(jnp.bfloat16), w1.astype(jnp.bfloat16),
                preferred_element_type=jnp.float32) + b1
    mu = h.mean(-1, keepdims=True)
    var = ((h - mu) ** 2).mean(-1, keepdims=True)
    hn = (h - mu) * jax.lax.rsqrt(var + LN_EPS) * gamma + beta
    hn = jnp.maximum(hn, 0.0)
    ref = jnp.dot(hn.astype(jnp.bfloat16), w2.astype(jnp.bfloat16),
                  preferred_element_type=jnp.float32) + b2

    assert jnp.allclose(out, ref, atol=1e-2, rtol=1e-2), (
        f"max abs err {jnp.max(jnp.abs(out - ref))}")

    print("KERNEL_OK")
</pallas_src>

<mosaic_0001>
module attributes {stable_mosaic.version = 11 : i64} {
  func.func @mlp_kernel(%arg0: i32, %arg1: memref<8x128xbf16, #tpu.memory_space<vmem>>, %arg2: memref<128x128xbf16, #tpu.memory_space<vmem>>, %arg3: memref<1x128xf32, #tpu.memory_space<vmem>>, %arg4: memref<1x128xf32, #tpu.memory_space<vmem>>, %arg5: memref<1x128xf32, #tpu.memory_space<vmem>>, %arg6: memref<128x128xbf16, #tpu.memory_space<vmem>>, %arg7: memref<1x128xf32, #tpu.memory_space<vmem>>, %arg8: memref<8x128xf32, #tpu.memory_space<vmem>>) attributes {dimension_semantics = [#tpu.dimension_semantics<parallel>], iteration_bounds = array<i64: 1>, scalar_prefetch = 0 : i64, scratch_operands = 0 : i64, tpu.core_type = #tpu.core_type<tc>, window_params = [{transform_indices = @transform_0, window_bounds = array<i64: 8, 128>}, {pipeline_mode = #tpu.pipeline_mode<synchronous>, transform_indices = @transform_1, window_bounds = array<i64: 128, 128>}, {pipeline_mode = #tpu.pipeline_mode<synchronous>, transform_indices = @transform_2, window_bounds = array<i64: 1, 128>}, {pipeline_mode = #tpu.pipeline_mode<synchronous>, transform_indices = @transform_3, window_bounds = array<i64: 1, 128>}, {pipeline_mode = #tpu.pipeline_mode<synchronous>, transform_indices = @transform_4, window_bounds = array<i64: 1, 128>}, {pipeline_mode = #tpu.pipeline_mode<synchronous>, transform_indices = @transform_5, window_bounds = array<i64: 128, 128>}, {pipeline_mode = #tpu.pipeline_mode<synchronous>, transform_indices = @transform_6, window_bounds = array<i64: 1, 128>}, {transform_indices = @transform_7, window_bounds = array<i64: 8, 128>}]} {
    %c0 = arith.constant 0 : index
    %c0_0 = arith.constant 0 : index
    %0 = vector.load %arg1[%c0, %c0_0] : memref<8x128xbf16, #tpu.memory_space<vmem>>, vector<8x128xbf16>
    %c0_1 = arith.constant 0 : index
    %c0_2 = arith.constant 0 : index
    %1 = vector.load %arg2[%c0_1, %c0_2] : memref<128x128xbf16, #tpu.memory_space<vmem>>, vector<128x128xbf16>
    %cst = arith.constant dense<0.000000e+00> : vector<8x128xf32>
    %2 = tpu.matmul %0, %1, %cst {dimension_numbers = #tpu.dot_dimension_numbers<[1], [0], [0], [1], [0, 0, 1, 1], [], []>} : vector<8x128xbf16>, vector<128x128xbf16>, vector<8x128xf32> -> vector<8x128xf32>
    %c0_3 = arith.constant 0 : index
    %c0_4 = arith.constant 0 : index
    %3 = vector.load %arg3[%c0_3, %c0_4] : memref<1x128xf32, #tpu.memory_space<vmem>>, vector<1x128xf32>
    %4 = vector.broadcast %3 : vector<1x128xf32> to vector<8x128xf32>
    %5 = arith.addf %2, %4 : vector<8x128xf32>
    %6 = tpu.iota {dimensions = array<i32: 1>} : vector<8x128xi32>
    %c32_i32 = arith.constant 32 : i32
    %7 = vector.broadcast %c32_i32 : i32 to vector<8x128xi32>
    %8 = arith.cmpi slt, %6, %7 : vector<8x128xi32>
    %cst_5 = arith.constant 0.000000e+00 : f32
    %9 = vector.broadcast %cst_5 : f32 to vector<8x128xf32>
    %10 = arith.select %8, %5, %9 : vector<8x128xi1>, vector<8x128xf32>
    %cst_6 = arith.constant dense<0.000000e+00> : vector<8xf32>
    %11 = vector.multi_reduction <add>, %10, %cst_6 [1] : vector<8x128xf32> to vector<8xf32>
    %12 = vector.shape_cast %11 : vector<8xf32> to vector<8x1xf32>
    %cst_7 = arith.constant 3.125000e-02 : f32
    %13 = vector.broadcast %cst_7 : f32 to vector<8x1xf32>
    %14 = arith.mulf %12, %13 : vector<8x1xf32>
    %15 = vector.broadcast %14 : vector<8x1xf32> to vector<8x128xf32>
    %16 = arith.subf %5, %15 : vector<8x128xf32>
    %cst_8 = arith.constant 0.000000e+00 : f32
    %17 = vector.broadcast %cst_8 : f32 to vector<8x128xf32>
    %18 = arith.select %8, %16, %17 : vector<8x128xi1>, vector<8x128xf32>
    %19 = arith.mulf %18, %18 : vector<8x128xf32>
    %cst_9 = arith.constant dense<0.000000e+00> : vector<8xf32>
    %20 = vector.multi_reduction <add>, %19, %cst_9 [1] : vector<8x128xf32> to vector<8xf32>
    %21 = vector.shape_cast %20 : vector<8xf32> to vector<8x1xf32>
    %cst_10 = arith.constant 3.125000e-02 : f32
    %22 = vector.broadcast %cst_10 : f32 to vector<8x1xf32>
    %23 = arith.mulf %21, %22 : vector<8x1xf32>
    %cst_11 = arith.constant 9.99999974E-6 : f32
    %24 = vector.broadcast %cst_11 : f32 to vector<8x1xf32>
    %25 = arith.addf %23, %24 : vector<8x1xf32>
    %26 = math.rsqrt %25 : vector<8x1xf32>
    %27 = vector.broadcast %26 : vector<8x1xf32> to vector<8x128xf32>
    %28 = arith.mulf %18, %27 : vector<8x128xf32>
    %c0_12 = arith.constant 0 : index
    %c0_13 = arith.constant 0 : index
    %29 = vector.load %arg4[%c0_12, %c0_13] : memref<1x128xf32, #tpu.memory_space<vmem>>, vector<1x128xf32>
    %30 = vector.broadcast %29 : vector<1x128xf32> to vector<8x128xf32>
    %31 = arith.mulf %28, %30 : vector<8x128xf32>
    %c0_14 = arith.constant 0 : index
    %c0_15 = arith.constant 0 : index
    %32 = vector.load %arg5[%c0_14, %c0_15] : memref<1x128xf32, #tpu.memory_space<vmem>>, vector<1x128xf32>
    %33 = vector.broadcast %32 : vector<1x128xf32> to vector<8x128xf32>
    %34 = arith.addf %31, %33 : vector<8x128xf32>
    %cst_16 = arith.constant 0.000000e+00 : f32
    %35 = vector.broadcast %cst_16 : f32 to vector<8x128xf32>
    %36 = arith.maximumf %34, %35 : vector<8x128xf32>
    %37 = arith.truncf %36 : vector<8x128xf32> to vector<8x128xbf16>
    %c0_17 = arith.constant 0 : index
    %c0_18 = arith.constant 0 : index
    %38 = vector.load %arg6[%c0_17, %c0_18] : memref<128x128xbf16, #tpu.memory_space<vmem>>, vector<128x128xbf16>
    %cst_19 = arith.constant dense<0.000000e+00> : vector<8x128xf32>
    %39 = tpu.matmul %37, %38, %cst_19 {dimension_numbers = #tpu.dot_dimension_numbers<[1], [0], [0], [1], [0, 0, 1, 1], [], []>} : vector<8x128xbf16>, vector<128x128xbf16>, vector<8x128xf32> -> vector<8x128xf32>
    %c0_20 = arith.constant 0 : index
    %c0_21 = arith.constant 0 : index
    %40 = vector.load %arg7[%c0_20, %c0_21] : memref<1x128xf32, #tpu.memory_space<vmem>>, vector<1x128xf32>
    %41 = vector.broadcast %40 : vector<1x128xf32> to vector<8x128xf32>
    %42 = arith.addf %39, %41 : vector<8x128xf32>
    %c0_22 = arith.constant 0 : index
    %c0_23 = arith.constant 0 : index
    %43 = vector.load %arg8[%c0_22, %c0_23] : memref<8x128xf32, #tpu.memory_space<vmem>>, vector<8x128xf32>
    tpu.vector_store %arg8[%c0_22, %c0_23], %42 {strides = array<i32>} : memref<8x128xf32, #tpu.memory_space<vmem>>, vector<8x128xf32>,
    return
  }
  func.func @transform_0(%arg0: i32) -> (i32, i32) {
    %c0_i32 = arith.constant 0 : i32
    %c0_i32_0 = arith.constant 0 : i32
    return %arg0, %c0_i32 : i32, i32
  }
  func.func @transform_1(%arg0: i32) -> (i32, i32) {
    %c0_i32 = arith.constant 0 : i32
    %c0_i32_0 = arith.constant 0 : i32
    %c0_i32_1 = arith.constant 0 : i32
    return %c0_i32, %c0_i32_0 : i32, i32
  }
  func.func @transform_2(%arg0: i32) -> (i32, i32) {
    %c0_i32 = arith.constant 0 : i32
    %c0_i32_0 = arith.constant 0 : i32
    %c0_i32_1 = arith.constant 0 : i32
    return %c0_i32, %c0_i32_0 : i32, i32
  }
  func.func @transform_3(%arg0: i32) -> (i32, i32) {
    %c0_i32 = arith.constant 0 : i32
    %c0_i32_0 = arith.constant 0 : i32
    %c0_i32_1 = arith.constant 0 : i32
    return %c0_i32, %c0_i32_0 : i32, i32
  }
  func.func @transform_4(%arg0: i32) -> (i32, i32) {
    %c0_i32 = arith.constant 0 : i32
    %c0_i32_0 = arith.constant 0 : i32
    %c0_i32_1 = arith.constant 0 : i32
    return %c0_i32, %c0_i32_0 : i32, i32
  }
  func.func @transform_5(%arg0: i32) -> (i32, i32) {
    %c0_i32 = arith.constant 0 : i32
    %c0_i32_0 = arith.constant 0 : i32
    %c0_i32_1 = arith.constant 0 : i32
    return %c0_i32, %c0_i32_0 : i32, i32
  }
  func.func @transform_6(%arg0: i32) -> (i32, i32) {
    %c0_i32 = arith.constant 0 : i32
    %c0_i32_0 = arith.constant 0 : i32
    %c0_i32_1 = arith.constant 0 : i32
    return %c0_i32, %c0_i32_0 : i32, i32
  }
  func.func @transform_7(%arg0: i32) -> (i32, i32) {
    %c0_i32 = arith.constant 0 : i32
    %c0_i32_0 = arith.constant 0 : i32
    return %arg0, %c0_i32 : i32, i32
  }
}

</mosaic_0001>

<llo_original>
// kernel: tpu_custom_call.1
$region0: #{tpu_custom_call.1}
  #allocation0 [shape = 'u32[]', space=smem, size = 0x4, offset = 0x4, fixed_abs, tag = 'smem constant byte address 0x4 - core index']
  #allocation1 [shape = 'u32[144,128]{1,0:T(1,128)}', space=vmem, size = 0x12000, scoped, tag = 'internal scratch']
  %s0 = inlined_call_operand.hbm [shape: bf16[8,128], index: 0, kind: input, shape index: {}]
  %s1 = inlined_call_operand.hbm [shape: bf16[128,128], index: 1, kind: input, shape index: {}]
  %s2 = inlined_call_operand.hbm [shape: f32[1,128], index: 2, kind: input, shape index: {}]
  %s3 = inlined_call_operand.hbm [shape: f32[1,128], index: 3, kind: input, shape index: {}]
  %s4 = inlined_call_operand.hbm [shape: f32[1,128], index: 4, kind: input, shape index: {}]
  %s5 = inlined_call_operand.hbm [shape: bf16[128,128], index: 5, kind: input, shape index: {}]
  %s6 = inlined_call_operand.hbm [shape: f32[1,128], index: 6, kind: input, shape index: {}]
  %s7 = inlined_call_operand.hbm [shape: f32[8,128], index: 7, kind: output, shape index: {}]
  %s8 = sld [smem:[#allocation0]]
  $region66: #{tpu_custom_call.1} parent=0
    _
  %s10 = ssub.s32 1, %s8
  %s11 = scalar_select 0, %s10, %s8
  $region1: #{tpu_custom_call.1} parent=0
    #allocation2 [shape = 'u8[2048]{0}', space=vmem, size = 0x800, scoped, tag = 'input window, operand 0, single buffered']
    #allocation3 [shape = 's32[1]{0}', space=sflag, size = 0x4, scoped, tag = 'scoped memory for tpu_custom_call.1']
    #allocation4 [shape = 's32[1]{0}', space=sflag, size = 0x4, scoped, tag = 'scoped memory for tpu_custom_call.1']
    #allocation5 [shape = 'u8[32768]{0}', space=vmem, size = 0x8000, scoped, tag = 'input window, operand 1, single buffered']
    #allocation6 [shape = 's32[1]{0}', space=sflag, size = 0x4, scoped, tag = 'scoped memory for tpu_custom_call.1']
    #allocation7 [shape = 'u8[512]{0}', space=vmem, size = 0x400, scoped, tag = 'input window, operand 2, single buffered']
    #allocation8 [shape = 'u8[512]{0}', space=vmem, size = 0x400, scoped, tag = 'input window, operand 3, single buffered']
    #allocation9 [shape = 's32[1]{0}', space=sflag, size = 0x4, scoped, tag = 'scoped memory for tpu_custom_call.1']
    #allocation10 [shape = 'u8[512]{0}', space=vmem, size = 0x400, scoped, tag = 'input window, operand 4, single buffered']
    #allocation11 [shape = 'u8[32768]{0}', space=vmem, size = 0x8000, scoped, tag = 'input window, operand 5, single buffered']
    #allocation12 [shape = 's32[1]{0}', space=sflag, size = 0x4, scoped, tag = 'scoped memory for tpu_custom_call.1']
    #allocation13 [shape = 'u8[512]{0}', space=vmem, size = 0x400, scoped, tag = 'input window, operand 6, single buffered']
    #allocation14 [shape = 'u8[4096]{0}', space=vmem, size = 0x1000, scoped, tag = 'output window, operand 0, single buffered']
    %12 = vsyncpa [#allocation3], 0
    %13 = vsyncpa [#allocation6], 0
    %14 = vsyncpa [#allocation9], 0
    %15 = vsyncpa [#allocation12], 0
    %16 = vsyncpa [#allocation4], 0
    // Predicated region
    $region2: #{tpu_custom_call.1} parent=1 // pred_check
      _
    $region3: #{tpu_custom_call.1} parent=1 // pred_check_branch
      %18 = sbr.rel (0) target = $region5
    $region4: #{tpu_custom_call.1} parent=1 // pred_region
      %s20 = ssub.s32 64, 64
      %21 = vsyncadd [#allocation3], %s20
      %s23 = sshll.u32 [#allocation2], 4
      %s24 = int_to_ptr.vmem [resolvable:$true] %s23
      %26 = dma.hbm_to_vmem [thread:$0]  %s0, 64, %s24, [#allocation3]
    $region5: #{tpu_custom_call.1} parent=1 // pred_fallthru
      _
    // Predicated region
    $region6: #{tpu_custom_call.1} parent=1 // pred_check
      _
    $region7: #{tpu_custom_call.1} parent=1 // pred_check_branch
      %28 = sbr.rel (0) target = $region9
    $region8: #{tpu_custom_call.1} parent=1 // pred_region
      %s30 = ssub.s32 1024, 1024
      %31 = vsyncadd [#allocation6], %s30
      %s32 = sshll.u32 [#allocation5], 4
      %s33 = int_to_ptr.vmem [resolvable:$true] %s32
      %38 = dma.hbm_to_vmem [thread:$0]  %s1, 1024, %s33, [#allocation6], 64, 64, 4
    $region9: #{tpu_custom_call.1} parent=1 // pred_fallthru
      _
    // Predicated region
    $region10: #{tpu_custom_call.1} parent=1 // pred_check
      _
    $region11: #{tpu_custom_call.1} parent=1 // pred_check_branch
      %40 = sbr.rel (0) target = $region13
    $region12: #{tpu_custom_call.1} parent=1 // pred_region
      %s42 = ssub.s32 16, 16
      %43 = vsyncadd [#allocation6], %s42
      %s45 = sshll.u32 [#allocation7], 4
      %s46 = int_to_ptr.vmem [resolvable:$true] %s45
      %48 = dma.hbm_to_vmem [thread:$0]  %s2, 16, %s46, [#allocation6]
    $region13: #{tpu_custom_call.1} parent=1 // pred_fallthru
      _
    // Predicated region
    $region14: #{tpu_custom_call.1} parent=1 // pred_check
      _
    $region15: #{tpu_custom_call.1} parent=1 // pred_check_branch
      %50 = sbr.rel (0) target = $region17
    $region16: #{tpu_custom_call.1} parent=1 // pred_region
      %s52 = ssub.s32 16, 16
      %53 = vsyncadd [#allocation9], %s52
      %s55 = sshll.u32 [#allocation8], 4
      %s56 = int_to_ptr.vmem [resolvable:$true] %s55
      %58 = dma.hbm_to_vmem [thread:$0]  %s3, 16, %s56, [#allocation9]
    $region17: #{tpu_custom_call.1} parent=1 // pred_fallthru
      _
    // Predicated region
    $region18: #{tpu_custom_call.1} parent=1 // pred_check
      _
    $region19: #{tpu_custom_call.1} parent=1 // pred_check_branch
      %60 = sbr.rel (0) target = $region21
    $region20: #{tpu_custom_call.1} parent=1 // pred_region
      %s62 = ssub.s32 16, 16
      %63 = vsyncadd [#allocation9], %s62
      %s65 = sshll.u32 [#allocation10], 4
      %s66 = int_to_ptr.vmem [resolvable:$true] %s65
      %68 = dma.hbm_to_vmem [thread:$0]  %s4, 16, %s66, [#allocation9]
    $region21: #{tpu_custom_call.1} parent=1 // pred_fallthru
      _
    // Predicated region
    $region22: #{tpu_custom_call.1} parent=1 // pred_check
      _
    $region23: #{tpu_custom_call.1} parent=1 // pred_check_branch
      %70 = sbr.rel (0) target = $region25
    $region24: #{tpu_custom_call.1} parent=1 // pred_region
      %s72 = ssub.s32 1024, 1024
      %73 = vsyncadd [#allocation12], %s72
      %s74 = sshll.u32 [#allocation11], 4
      %s75 = int_to_ptr.vmem [resolvable:$true] %s74
      %80 = dma.hbm_to_vmem [thread:$0]  %s5, 1024, %s75, [#allocation12], 64, 64, 4
    $region25: #{tpu_custom_call.1} parent=1 // pred_fallthru
      _
    // Predicated region
    $region26: #{tpu_custom_call.1} parent=1 // pred_check
      _
    $region27: #{tpu_custom_call.1} parent=1 // pred_check_branch
      %82 = sbr.rel (0) target = $region29
    $region28: #{tpu_custom_call.1} parent=1 // pred_region
      %s84 = ssub.s32 16, 16
      %85 = vsyncadd [#allocation12], %s84
      %s87 = sshll.u32 [#allocation13], 4
      %s88 = int_to_ptr.vmem [resolvable:$true] %s87
      %90 = dma.hbm_to_vmem [thread:$0]  %s6, 16, %s88, [#allocation12]
    $region29: #{tpu_custom_call.1} parent=1 // pred_fallthru
      _
    // Predicated region
    $region30: #{tpu_custom_call.1} parent=1 // pred_check
      _
    $region31: #{tpu_custom_call.1} parent=1 // pred_check_branch
      %92 = sbr.rel (0) target = $region33
    $region32: #{tpu_custom_call.1} parent=1 // pred_region
      %93 = dma.done [#allocation3], 64
    $region33: #{tpu_custom_call.1} parent=1 // pred_fallthru
      _
    // Predicated region
    $region34: #{tpu_custom_call.1} parent=1 // pred_check
      _
    $region35: #{tpu_custom_call.1} parent=1 // pred_check_branch
      %95 = sbr.rel (0) target = $region37
    $region36: #{tpu_custom_call.1} parent=1 // pred_region
      %96 = dma.done [#allocation6], 1024
    $region37: #{tpu_custom_call.1} parent=1 // pred_fallthru
      _
    // Predicated region
    $region38: #{tpu_custom_call.1} parent=1 // pred_check
      _
    $region39: #{tpu_custom_call.1} parent=1 // pred_check_branch
      %98 = sbr.rel (0) target = $region41
    $region40: #{tpu_custom_call.1} parent=1 // pred_region
      %99 = dma.done [#allocation6], 16
    $region41: #{tpu_custom_call.1} parent=1 // pred_fallthru
      _
    // Predicated region
    $region42: #{tpu_custom_call.1} parent=1 // pred_check
      _
    $region43: #{tpu_custom_call.1} parent=1 // pred_check_branch
      %101 = sbr.rel (0) target = $region45
    $region44: #{tpu_custom_call.1} parent=1 // pred_region
      %102 = dma.done [#allocation9], 16
    $region45: #{tpu_custom_call.1} parent=1 // pred_fallthru
      _
    // Predicated region
    $region46: #{tpu_custom_call.1} parent=1 // pred_check
      _
    $region47: #{tpu_custom_call.1} parent=1 // pred_check_branch
      %104 = sbr.rel (0) target = $region49
    $region48: #{tpu_custom_call.1} parent=1 // pred_region
      %105 = dma.done [#allocation9], 16
    $region49: #{tpu_custom_call.1} parent=1 // pred_fallthru
      _
    // Predicated region
    $region50: #{tpu_custom_call.1} parent=1 // pred_check
      _
    $region51: #{tpu_custom_call.1} parent=1 // pred_check_branch
      %107 = sbr.rel (0) target = $region53
    $region52: #{tpu_custom_call.1} parent=1 // pred_region
      %108 = dma.done [#allocation12], 1024
    $region53: #{tpu_custom_call.1} parent=1 // pred_fallthru
      _
    // Predicated region
    $region54: #{tpu_custom_call.1} parent=1 // pred_check
      _
    $region55: #{tpu_custom_call.1} parent=1 // pred_check_branch
      %110 = sbr.rel (0) target = $region57
    $region56: #{tpu_custom_call.1} parent=1 // pred_region
      %111 = dma.done [#allocation12], 16
    $region57: #{tpu_custom_call.1} parent=1 // pred_fallthru
      _
    %v113 = vld [vmem:[#allocation2] sm:$0xf]
    %v114 = vld [vmem:[#allocation5] sm:$0xf]
    %v115 = vld [vmem:[#allocation5 + $0x4] sm:$0xf]
    %v116 = vld [vmem:[#allocation5 + $0x8] sm:$0xf]
    %v117 = vld [vmem:[#allocation5 + $0xc] sm:$0xf]
    %v118 = vld [vmem:[#allocation5 + $0x10] sm:$0xf]
    %v119 = vld [vmem:[#allocation5 + $0x14] sm:$0xf]
    %v120 = vld [vmem:[#allocation5 + $0x18] sm:$0xf]
    %v121 = vld [vmem:[#allocation5 + $0x1c] sm:$0xf]
    %v122 = vld [vmem:[#allocation5 + $0x20] sm:$0xf]
    %v123 = vld [vmem:[#allocation5 + $0x24] sm:$0xf]
    %v124 = vld [vmem:[#allocation5 + $0x28] sm:$0xf]
    %v125 = vld [vmem:[#allocation5 + $0x2c] sm:$0xf]
    %v126 = vld [vmem:[#allocation5 + $0x30] sm:$0xf]
    %v127 = vld [vmem:[#allocation5 + $0x34] sm:$0xf]
    %v128 = vld [vmem:[#allocation5 + $0x38] sm:$0xf]
    %v129 = vld [vmem:[#allocation5 + $0x3c] sm:$0xf]
    %v130 = vld [vmem:[#allocation7] sm:$0x1]
    %v132 = vlaneseq
    %v133 = vshrl.u32 %v132, 7
    %v134 = vsub.s32 0, %v133
    %v135 = vrot.slane %v130, %v134
    %v153 = vunpack.c.l.b16 %v114
    %v154 = vunpack.c.l.b16 %v115
    %v155 = vunpack.c.l.b16 %v116
    %v156 = vunpack.c.l.b16 %v117
    %v157 = vunpack.c.l.b16 %v118
    %v158 = vunpack.c.l.b16 %v119
    %v159 = vunpack.c.l.b16 %v120
    %v160 = vunpack.c.l.b16 %v121
    %v161 = vunpack.c.l.b16 %v122
    %v162 = vunpack.c.l.b16 %v123
    %v163 = vunpack.c.l.b16 %v124
    %v164 = vunpack.c.l.b16 %v125
    %v165 = vunpack.c.l.b16 %v126
    %v166 = vunpack.c.l.b16 %v127
    %v167 = vunpack.c.l.b16 %v128
    %v168 = vunpack.c.l.b16 %v129
    %v169 = vpack.c.b16 %v154, %v153
    %v170 = vpack.c.b16 %v156, %v155
    %v171 = vpack.c.b16 %v158, %v157
    %v172 = vpack.c.b16 %v160, %v159
    %v173 = vpack.c.b16 %v162, %v161
    %v174 = vpack.c.b16 %v164, %v163
    %v175 = vpack.c.b16 %v166, %v165
    %v176 = vpack.c.b16 %v168, %v167
    %185 = vmatprep.subr.bf16.mxu0 0
    %186 = vmatpush1.bf16.msra.mxu0 %v169
    %187 = vmatprep.subr.bf16.mxu0 0
    %188 = vmatpush1.bf16.msra.mxu0 %v170
    %189 = vmatprep.subr.bf16.mxu0 0
    %190 = vmatpush1.bf16.msra.mxu0 %v171
    %191 = vmatprep.subr.bf16.mxu0 0
    %192 = vmatpush1.bf16.msra.mxu0 %v172
    %193 = vmatprep.subr.bf16.mxu0 0
    %194 = vmatpush1.bf16.msra.mxu0 %v173
    %195 = vmatprep.subr.bf16.mxu0 0
    %196 = vmatpush1.bf16.msra.mxu0 %v174
    %197 = vmatprep.subr.bf16.mxu0 0
    %198 = vmatpush1.bf16.msra.mxu0 %v175
    %199 = vmatprep.subr.bf16.mxu0 0
    %200 = vmatpush1.bf16.msra.mxu0 %v176
    %201 = vmatprep.subr.bf16.mxu0 0
    %202 = vmatpush1.bf16.msra.mxu0 0
    %203 = vmatprep.subr.bf16.mxu0 0
    %204 = vmatpush1.bf16.msra.mxu0 0
    %205 = vmatprep.subr.bf16.mxu0 0
    %206 = vmatpush1.bf16.msra.mxu0 0
    %207 = vmatprep.subr.bf16.mxu0 0
    %208 = vmatpush1.bf16.msra.mxu0 0
    %209 = vmatprep.subr.bf16.mxu0 0
    %210 = vmatpush1.bf16.msra.mxu0 0
    %211 = vmatprep.subr.bf16.mxu0 0
    %212 = vmatpush1.bf16.msra.mxu0 0
    %213 = vmatprep.subr.bf16.mxu0 0
    %214 = vmatpush1.bf16.msra.mxu0 0
    %215 = vmatprep.subr.bf16.mxu0 0
    %216 = vmatpush1.bf16.msra.mxu0 0
    %217 = vmatprep.mubr.bf16.mxu0 0
    %218 = vmatmul.mubr.bf16.gmra.mrb[0].mxu0 %v113
    %v219 = vpop.f32.mrb[0].mxu0
    %v220 = vadd.f32 %v135, %v219
    %v221 = vpop.f32.mrb[0].mxu0
    %v222 = vpop.f32.mrb[0].mxu0
    %v223 = vpop.f32.mrb[0].mxu0
    %224 = vdwg.mxu0
    %v225 = vlaneseq
    %v226 = vand.u32 %v225, 127
    %vm227 = vcmp.lt.s32.totalorder %v226, 32
    %v228 = vsel %vm227, %v220, 0.0
    %229 = vadd.xlane.f32.xlu0 %v228
    %v230 = vpop.xlane.xlu0 %229
    %v231 = vmul.f32 %v230, 0.03125
    %v232 = vsub.f32 %v220, %v231
    %v233 = vsel %vm227, %v232, 0.0
    %v234 = vmul.f32 %v233, %v233
    %235 = vadd.xlane.f32.xlu0 %v234
    %v236 = vpop.xlane.xlu0 %235
    %v237 = vmul.f32 %v236, 0.03125
    %v238 = vadd.f32 %v237, 1e-05
    %v239 = vrsqrt.pop %v238
    %v240 = vmul.f32 %v233, %v239
    %v241 = vld [vmem:[#allocation8] sm:$0x1]
    %v243 = vlaneseq
    %v244 = vshrl.u32 %v243, 7
    %v245 = vsub.s32 0, %v244
    %v246 = vrot.slane %v241, %v245
    %v248 = vmul.f32 %v240, %v246
    %v249 = vld [vmem:[#allocation10] sm:$0x1]
    %v251 = vlaneseq
    %v252 = vshrl.u32 %v251, 7
    %v253 = vsub.s32 0, %v252
    %v254 = vrot.slane %v249, %v253
    %v256 = vadd.f32 %v248, %v254
    %v257 = vmax.f32 %v256, 0.0
    %v258 = vpack.c.bf16 %v257, %v257
    %v259 = vld [vmem:[#allocation11] sm:$0xf]
    %v260 = vld [vmem:[#allocation11 + $0x4] sm:$0xf]
    %v261 = vld [vmem:[#allocation11 + $0x8] sm:$0xf]
    %v262 = vld [vmem:[#allocation11 + $0xc] sm:$0xf]
    %v263 = vld [vmem:[#allocation11 + $0x10] sm:$0xf]
    %v264 = vld [vmem:[#allocation11 + $0x14] sm:$0xf]
    %v265 = vld [vmem:[#allocation11 + $0x18] sm:$0xf]
    %v266 = vld [vmem:[#allocation11 + $0x1c] sm:$0xf]
    %v267 = vld [vmem:[#allocation11 + $0x20] sm:$0xf]
    %v268 = vld [vmem:[#allocation11 + $0x24] sm:$0xf]
    %v269 = vld [vmem:[#allocation11 + $0x28] sm:$0xf]
    %v270 = vld [vmem:[#allocation11 + $0x2c] sm:$0xf]
    %v271 = vld [vmem:[#allocation11 + $0x30] sm:$0xf]
    %v272 = vld [vmem:[#allocation11 + $0x34] sm:$0xf]
    %v273 = vld [vmem:[#allocation11 + $0x38] sm:$0xf]
    %v274 = vld [vmem:[#allocation11 + $0x3c] sm:$0xf]
    %v275 = vld [vmem:[#allocation13] sm:$0x1]
    %v277 = vlaneseq
    %v278 = vshrl.u32 %v277, 7
    %v279 = vsub.s32 0, %v278
    %v280 = vrot.slane %v275, %v279
    %v298 = vunpack.c.l.b16 %v259
    %v299 = vunpack.c.l.b16 %v260
    %v300 = vunpack.c.l.b16 %v261
    %v301 = vunpack.c.l.b16 %v262
    %v302 = vunpack.c.l.b16 %v263
    %v303 = vunpack.c.l.b16 %v264
    %v304 = vunpack.c.l.b16 %v265
    %v305 = vunpack.c.l.b16 %v266
    %v306 = vunpack.c.l.b16 %v267
    %v307 = vunpack.c.l.b16 %v268
    %v308 = vunpack.c.l.b16 %v269
    %v309 = vunpack.c.l.b16 %v270
    %v310 = vunpack.c.l.b16 %v271
    %v311 = vunpack.c.l.b16 %v272
    %v312 = vunpack.c.l.b16 %v273
    %v313 = vunpack.c.l.b16 %v274
    %v314 = vpack.c.b16 %v299, %v298
    %v315 = vpack.c.b16 %v301, %v300
    %v316 = vpack.c.b16 %v303, %v302
    %v317 = vpack.c.b16 %v305, %v304
    %v318 = vpack.c.b16 %v307, %v306
    %v319 = vpack.c.b16 %v309, %v308
    %v320 = vpack.c.b16 %v311, %v310
    %v321 = vpack.c.b16 %v313, %v312
    %330 = vmatprep.subr.bf16.mxu0 0
    %331 = vmatpush1.bf16.msra.mxu0 %v314
    %332 = vmatprep.subr.bf16.mxu0 0
    %333 = vmatpush1.bf16.msra.mxu0 %v315
    %334 = vmatprep.subr.bf16.mxu0 0
    %335 = vmatpush1.bf16.msra.mxu0 %v316
    %336 = vmatprep.subr.bf16.mxu0 0
    %337 = vmatpush1.bf16.msra.mxu0 %v317
    %338 = vmatprep.subr.bf16.mxu0 0
    %339 = vmatpush1.bf16.msra.mxu0 %v318
    %340 = vmatprep.subr.bf16.mxu0 0
    %341 = vmatpush1.bf16.msra.mxu0 %v319
    %342 = vmatprep.subr.bf16.mxu0 0
    %343 = vmatpush1.bf16.msra.mxu0 %v320
    %344 = vmatprep.subr.bf16.mxu0 0
    %345 = vmatpush1.bf16.msra.mxu0 %v321
    %346 = vmatprep.subr.bf16.mxu0 0
    %347 = vmatpush1.bf16.msra.mxu0 0
    %348 = vmatprep.subr.bf16.mxu0 0
    %349 = vmatpush1.bf16.msra.mxu0 0
    %350 = vmatprep.subr.bf16.mxu0 0
    %351 = vmatpush1.bf16.msra.mxu0 0
    %352 = vmatprep.subr.bf16.mxu0 0
    %353 = vmatpush1.bf16.msra.mxu0 0
    %354 = vmatprep.subr.bf16.mxu0 0
    %355 = vmatpush1.bf16.msra.mxu0 0
    %356 = vmatprep.subr.bf16.mxu0 0
    %357 = vmatpush1.bf16.msra.mxu0 0
    %358 = vmatprep.subr.bf16.mxu0 0
    %359 = vmatpush1.bf16.msra.mxu0 0
    %360 = vmatprep.subr.bf16.mxu0 0
    %361 = vmatpush1.bf16.msra.mxu0 0
    %362 = vmatprep.mubr.bf16.mxu0 0
    %363 = vmatmul.mubr.bf16.gmra.mrb[0].mxu0 %v258
    %v364 = vpop.f32.mrb[0].mxu0
    %v365 = vadd.f32 %v280, %v364
    %v366 = vpop.f32.mrb[0].mxu0
    %v367 = vpop.f32.mrb[0].mxu0
    %v368 = vpop.f32.mrb[0].mxu0
    %369 = vdwg.mxu0
    %370 = vst [vmem:[#allocation14] sm:$0xff] %v365
    // Predicated region
    $region58: #{tpu_custom_call.1} parent=1 // pred_check
      _
    $region59: #{tpu_custom_call.1} parent=1 // pred_check_branch
      %372 = sbr.rel (0) target = $region61
    $region60: #{tpu_custom_call.1} parent=1 // pred_region
      %s374 = ssub.s32 128, 128
      %375 = vsyncadd [#allocation4], %s374
      %s377 = sshll.u32 [#allocation14], 4
      %s378 = int_to_ptr.vmem [resolvable:$true] %s377
      %380 = dma.vmem_to_hbm [thread:$0]  %s378, 128, %s7, [#allocation4]
    $region61: #{tpu_custom_call.1} parent=1 // pred_fallthru
      _
    // Predicated region
    $region62: #{tpu_custom_call.1} parent=1 // pred_check
      _
    $region63: #{tpu_custom_call.1} parent=1 // pred_check_branch
      %382 = sbr.rel (0) target = $region65
    $region64: #{tpu_custom_call.1} parent=1 // pred_region
      %383 = dma.done [#allocation4], 128
    $region65: #{tpu_custom_call.1} parent=1 // pred_fallthru
      _
    %384 = vsyncpa [#allocation3], 1
    %385 = vsyncpa [#allocation6], 1
    %386 = vsyncpa [#allocation9], 1
    %387 = vsyncpa [#allocation12], 1
    %388 = vsyncpa [#allocation4], 1

</llo_original>
